<compile_context>
chip_gen: v6e
topology: v6e:2x2x1
jax: 0.10.0
libtpu: 0.0.40
codegen_flags: <defaults>
</compile_context>

<pallas_src>
import functools

import jax
import jax.numpy as jnp
from jax.experimental import pallas as pl
from jax.experimental.pallas import tpu as pltpu

EPS = 1e-5  # nn.BatchNorm2d default eps


# ---------------------------------------------------------------------------
# Fused Pallas kernel: conv1 -> bn1 -> relu -> conv2 -> bn2 -> relu
# ---------------------------------------------------------------------------
def _fused_kernel(x_ref, w1_ref, w2_ref, bn_ref, o_ref, *, n, h, w, c_out):
    # x_ref  : (N*H, W*Cin)        lane-dense input, lane = w*Cin + c
    # w1_ref : (3, W*Cin,  W*Cout) banded conv1 weights (one per kernel row kh)
    # w2_ref : (3, W*Cout, W*Cout) banded conv2 weights
    # bn_ref : (4, W*Cout)         lane-tiled [gamma1, beta1, gamma2, beta2]
    # o_ref  : (N*H, W*Cout)       lane-dense output
    nh = n * h
    wc = w * c_out
    count = n * h * w  # elements per channel for BN batch statistics

    # boundary masks for the kh=0 / kh=2 row taps (per-image first/last rows)
    rid = jax.lax.broadcasted_iota(jnp.int32, (nh, wc), 0)
    not_first = (rid % h) != 0        # row r-1 exists inside the same image
    not_last = (rid % h) != (h - 1)   # row r+1 exists inside the same image

    def conv(src, w_ref):
        # 3x3 conv as 3 batched banded matmuls (kw + width zero-padding folded
        # into the weights); the kh row offsets via sublane roll + mask.
        y0 = jnp.dot(src, w_ref[0], preferred_element_type=jnp.float32)
        y1 = jnp.dot(src, w_ref[1], preferred_element_type=jnp.float32)
        y2 = jnp.dot(src, w_ref[2], preferred_element_type=jnp.float32)
        up = jnp.where(not_first, pltpu.roll(y0, shift=1, axis=0), 0.0)
        dn = jnp.where(not_last, pltpu.roll(y2, shift=nh - 1, axis=0), 0.0)
        return up + y1 + dn

    def bn_relu(y, gamma_lane, beta_lane):
        # one pass for sum / sum-of-squares (stacked -> single group-reduce),
        # then one fused FMA + ReLU pass.
        s = jnp.concatenate(
            [jnp.sum(y, axis=0, keepdims=True),
             jnp.sum(y * y, axis=0, keepdims=True)], axis=0)        # (2, wc)
        # channel group-sum + broadcast across the W lane groups via
        # log2(W) strided lane rolls (requires W to be a power of two).
        shift = c_out
        while shift < wc:
            s = s + pltpu.roll(s, shift=shift, axis=1)
            shift *= 2
        mean = s[0:1, :] * (1.0 / count)
        var = s[1:2, :] * (1.0 / count) - mean * mean               # biased var
        scale = gamma_lane * jax.lax.rsqrt(var + EPS)
        offs = beta_lane - mean * scale
        return jnp.maximum(y * scale + offs, 0.0)

    x = x_ref[...]
    # stage 1: conv1 (bias cancelled by train-mode BN) -> bn1 -> relu
    y = bn_relu(conv(x, w1_ref), bn_ref[0:1, :], bn_ref[1:2, :])
    # stage 2: conv2 -> bn2 -> relu, single lane-dense store
    y = bn_relu(conv(y, w2_ref), bn_ref[2:3, :], bn_ref[3:4, :])
    o_ref[...] = y.astype(o_ref.dtype)


# ---------------------------------------------------------------------------
# One-time parameter preparation (hoisted out of the per-call hot path)
# ---------------------------------------------------------------------------
def _banded_weights(w_oihw, width):
    # PyTorch conv weight (Cout, Cin, 3, 3) -> (3, width*Cin, width*Cout)
    # banded matrices: entry [w_in*Cin+c, w_out*Cout+o] = w[o,c,kh,kw] where
    # w_in = w_out + kw - 1 (zero otherwise -> width zero-padding built in).
    c_out, c_in, kh_sz, kw_sz = w_oihw.shape
    mats = []
    for kh in range(kh_sz):
        m = jnp.zeros((width * c_in, width * c_out), jnp.float32)
        for kw in range(kw_sz):
            s = jnp.eye(width, k=1 - kw, dtype=jnp.float32)
            b = jnp.transpose(w_oihw[:, :, kh, kw]).astype(jnp.float32)
            m = m + jnp.einsum('ab,cd->acbd', s, b).reshape(width * c_in,
                                                            width * c_out)
        mats.append(m)
    return jnp.stack(mats, axis=0)


def prepare_conv_block_params(params, width):
    """Precompute kernel-ready weights once; reuse across forward calls."""
    assert width & (width - 1) == 0, "lane group-reduce assumes W power of 2"
    w1b = _banded_weights(params["w1"], width)          # (3, W*Cin,  W*Cout)
    w2b = _banded_weights(params["w2"], width)          # (3, W*Cout, W*Cout)
    # lane-tiled BN params (conv biases intentionally unused: cancelled by
    # the train-mode BatchNorm mean subtraction)
    bn = jnp.stack([jnp.tile(params["g1"], width),
                    jnp.tile(params["beta1"], width),
                    jnp.tile(params["g2"], width),
                    jnp.tile(params["beta2"], width)],
                   axis=0).astype(jnp.float32)          # (4, W*Cout)
    return {"w1b": w1b, "w2b": w2b, "bn": bn}


# ---------------------------------------------------------------------------
# Hot path: layout plumbing + single pallas_call
# ---------------------------------------------------------------------------
@jax.jit
def conv_block_forward(x_nchw, prepared):
    n, c_in, h, w = x_nchw.shape
    c_out = prepared["bn"].shape[1] // w

    # NCHW -> (N*H, W*Cin) lane-dense, no padding needed
    x2d = jnp.transpose(x_nchw, (0, 2, 3, 1)).reshape(n * h, w * c_in)
    x2d = x2d.astype(jnp.float32)

    kernel = functools.partial(_fused_kernel, n=n, h=h, w=w, c_out=c_out)
    vmem = pl.BlockSpec(memory_space=pltpu.MemorySpace.VMEM)
    out = pl.pallas_call(
        kernel,
        out_shape=jax.ShapeDtypeStruct((n * h, w * c_out), jnp.float32),
        in_specs=[vmem] * 4,
        out_specs=vmem,
        compiler_params=pltpu.CompilerParams(
            vmem_limit_bytes=32 * 1024 * 1024),
    )(x2d, prepared["w1b"], prepared["w2b"], prepared["bn"])

    # (N*H, W*Cout) -> NCHW
    return jnp.transpose(out.reshape(n, h, w, c_out), (0, 3, 1, 2))


# ---------------------------------------------------------------------------
# Pure-JAX reference (exact PyTorch semantics, bias included) for correctness
# ---------------------------------------------------------------------------
def reference_forward(x_nchw, params):
    def conv(x, wgt, b):
        y = jax.lax.conv_general_dilated(
            x, wgt, window_strides=(1, 1), padding=((1, 1), (1, 1)),
            dimension_numbers=("NCHW", "OIHW", "NCHW"))
        return y + b.reshape(1, -1, 1, 1)

    def bn(x, g, bt):
        mean = jnp.mean(x, axis=(0, 2, 3), keepdims=True)
        var = jnp.mean((x - mean) ** 2, axis=(0, 2, 3), keepdims=True)
        return (x - mean) / jnp.sqrt(var + EPS) * g.reshape(1, -1, 1, 1) \
            + bt.reshape(1, -1, 1, 1)

    x = jax.nn.relu(bn(conv(x_nchw, params["w1"], params["b1"]),
                       params["g1"], params["beta1"]))
    x = jax.nn.relu(bn(conv(x, params["w2"], params["b2"]),
                       params["g2"], params["beta2"]))
    return x


if __name__ == "__main__":
    # Module config: conv_block(in_c=4, out_c=8, k_size=3); input (2, 4, 16, 16)
    N, IN_C, OUT_C, H, W, K = 2, 4, 8, 16, 16, 3

    key = jax.random.PRNGKey(0)
    k_x, k_w1, k_b1, k_w2, k_b2 = jax.random.split(key, 5)

    x = jax.random.normal(k_x, (N, IN_C, H, W), dtype=jnp.float32)

    params = {
        "w1": 0.1 * jax.random.normal(k_w1, (OUT_C, IN_C, K, K), jnp.float32),
        "b1": 0.1 * jax.random.normal(k_b1, (OUT_C,), jnp.float32),
        "w2": 0.1 * jax.random.normal(k_w2, (OUT_C, OUT_C, K, K), jnp.float32),
        "b2": 0.1 * jax.random.normal(k_b2, (OUT_C,), jnp.float32),
        # BatchNorm2d default init: weight=1, bias=0 (kept generic)
        "g1": jnp.ones((OUT_C,), jnp.float32),
        "beta1": jnp.zeros((OUT_C,), jnp.float32),
        "g2": jnp.ones((OUT_C,), jnp.float32),
        "beta2": jnp.zeros((OUT_C,), jnp.float32),
    }

    # one-time (out of the hot path): banded weights + BN lane tiles
    prepared = jax.tree_util.tree_map(jax.block_until_ready,
                                      prepare_conv_block_params(params, W))

    out = conv_block_forward(x, prepared)
    out = jax.block_until_ready(out)

    ref = reference_forward(x, params)
    assert out.shape == (N, OUT_C, H, W), out.shape
    assert jnp.allclose(out, ref, atol=1e-3, rtol=1e-3), \
        float(jnp.max(jnp.abs(out - ref)))

    # TODO(synk): BatchNorm running_mean/running_var updates (training side
    # effect) are not modeled; forward output uses batch stats as in PyTorch
    # train mode.

    print("KERNEL_OK")
</pallas_src>

<mosaic_0001>
module attributes {stable_mosaic.version = 11 : i64} {
  func.func @_fused_kernel(%arg0: memref<32x64xf32, #tpu.memory_space<vmem>>, %arg1: memref<3x64x128xf32, #tpu.memory_space<vmem>>, %arg2: memref<3x128x128xf32, #tpu.memory_space<vmem>>, %arg3: memref<4x128xf32, #tpu.memory_space<vmem>>, %arg4: memref<32x128xf32, #tpu.memory_space<vmem>>) attributes {dimension_semantics = [], scalar_prefetch = 0 : i64, scratch_operands = 0 : i64, tpu.core_type = #tpu.core_type<tc>} {
    %0 = tpu.iota {dimensions = array<i32: 0>} : vector<32x128xi32>
    %c16_i32 = arith.constant 16 : i32
    %c0_i32 = arith.constant 0 : i32
    %1 = arith.cmpi eq, %c16_i32, %c0_i32 : i32
    %c1_i32 = arith.constant 1 : i32
    %2 = arith.select %1, %c1_i32, %c16_i32 : i32
    %3 = vector.broadcast %2 : i32 to vector<32x128xi32>
    %4 = arith.remsi %0, %3 : vector<32x128xi32>
    %c0_i32_0 = arith.constant 0 : i32
    %5 = vector.broadcast %c0_i32_0 : i32 to vector<32x128xi32>
    %6 = arith.cmpi ne, %4, %5 : vector<32x128xi32>
    %c0_i32_1 = arith.constant 0 : i32
    %7 = vector.broadcast %c0_i32_1 : i32 to vector<32x128xi32>
    %8 = arith.cmpi slt, %4, %7 : vector<32x128xi32>
    %c0_i32_2 = arith.constant 0 : i32
    %9 = arith.cmpi slt, %2, %c0_i32_2 : i32
    %10 = vector.broadcast %9 : i1 to vector<32x128xi1>
    %11 = vector.broadcast %10 : vector<32x128xi1> to vector<32x128xi1>
    %12 = arith.xori %8, %11 : vector<32x128xi1>
    %13 = arith.andi %12, %6 : vector<32x128xi1>
    %14 = vector.broadcast %2 : i32 to vector<32x128xi32>
    %15 = arith.addi %4, %14 : vector<32x128xi32>
    %16 = arith.select %13, %15, %4 : vector<32x128xi1>, vector<32x128xi32>
    %c0_i32_3 = arith.constant 0 : i32
    %17 = vector.broadcast %c0_i32_3 : i32 to vector<32x128xi32>
    %18 = arith.cmpi ne, %16, %17 : vector<32x128xi32>
    %c16_i32_4 = arith.constant 16 : i32
    %c0_i32_5 = arith.constant 0 : i32
    %19 = arith.cmpi eq, %c16_i32_4, %c0_i32_5 : i32
    %c1_i32_6 = arith.constant 1 : i32
    %20 = arith.select %19, %c1_i32_6, %c16_i32_4 : i32
    %21 = vector.broadcast %20 : i32 to vector<32x128xi32>
    %22 = arith.remsi %0, %21 : vector<32x128xi32>
    %c0_i32_7 = arith.constant 0 : i32
    %23 = vector.broadcast %c0_i32_7 : i32 to vector<32x128xi32>
    %24 = arith.cmpi ne, %22, %23 : vector<32x128xi32>
    %c0_i32_8 = arith.constant 0 : i32
    %25 = vector.broadcast %c0_i32_8 : i32 to vector<32x128xi32>
    %26 = arith.cmpi slt, %22, %25 : vector<32x128xi32>
    %c0_i32_9 = arith.constant 0 : i32
    %27 = arith.cmpi slt, %20, %c0_i32_9 : i32
    %28 = vector.broadcast %27 : i1 to vector<32x128xi1>
    %29 = vector.broadcast %28 : vector<32x128xi1> to vector<32x128xi1>
    %30 = arith.xori %26, %29 : vector<32x128xi1>
    %31 = arith.andi %30, %24 : vector<32x128xi1>
    %32 = vector.broadcast %20 : i32 to vector<32x128xi32>
    %33 = arith.addi %22, %32 : vector<32x128xi32>
    %34 = arith.select %31, %33, %22 : vector<32x128xi1>, vector<32x128xi32>
    %c15_i32 = arith.constant 15 : i32
    %35 = vector.broadcast %c15_i32 : i32 to vector<32x128xi32>
    %36 = arith.cmpi ne, %34, %35 : vector<32x128xi32>
    %c0 = arith.constant 0 : index
    %c0_10 = arith.constant 0 : index
    %37 = vector.load %arg0[%c0, %c0_10] : memref<32x64xf32, #tpu.memory_space<vmem>>, vector<32x64xf32>
    %c0_11 = arith.constant 0 : index
    %c0_12 = arith.constant 0 : index
    %c0_13 = arith.constant 0 : index
    %38 = vector.load %arg1[%c0_11, %c0_12, %c0_13] : memref<3x64x128xf32, #tpu.memory_space<vmem>>, vector<1x64x128xf32>
    %39 = vector.shape_cast %38 : vector<1x64x128xf32> to vector<64x128xf32>
    %cst = arith.constant dense<0.000000e+00> : vector<32x128xf32>
    %40 = tpu.matmul %37, %39, %cst {dimension_numbers = #tpu.dot_dimension_numbers<[1], [0], [0], [1], [0, 0, 1, 1], [], []>} : vector<32x64xf32>, vector<64x128xf32>, vector<32x128xf32> -> vector<32x128xf32>
    %c1 = arith.constant 1 : index
    %c0_14 = arith.constant 0 : index
    %c0_15 = arith.constant 0 : index
    %41 = vector.load %arg1[%c1, %c0_14, %c0_15] : memref<3x64x128xf32, #tpu.memory_space<vmem>>, vector<1x64x128xf32>
    %42 = vector.shape_cast %41 : vector<1x64x128xf32> to vector<64x128xf32>
    %cst_16 = arith.constant dense<0.000000e+00> : vector<32x128xf32>
    %43 = tpu.matmul %37, %42, %cst_16 {dimension_numbers = #tpu.dot_dimension_numbers<[1], [0], [0], [1], [0, 0, 1, 1], [], []>} : vector<32x64xf32>, vector<64x128xf32>, vector<32x128xf32> -> vector<32x128xf32>
    %c2 = arith.constant 2 : index
    %c0_17 = arith.constant 0 : index
    %c0_18 = arith.constant 0 : index
    %44 = vector.load %arg1[%c2, %c0_17, %c0_18] : memref<3x64x128xf32, #tpu.memory_space<vmem>>, vector<1x64x128xf32>
    %45 = vector.shape_cast %44 : vector<1x64x128xf32> to vector<64x128xf32>
    %cst_19 = arith.constant dense<0.000000e+00> : vector<32x128xf32>
    %46 = tpu.matmul %37, %45, %cst_19 {dimension_numbers = #tpu.dot_dimension_numbers<[1], [0], [0], [1], [0, 0, 1, 1], [], []>} : vector<32x64xf32>, vector<64x128xf32>, vector<32x128xf32> -> vector<32x128xf32>
    %c1_i32_20 = arith.constant 1 : i32
    %47 = tpu.dynamic_rotate %40 by %c1_i32_20 dim 0 : vector<32x128xf32>, i32 -> vector<32x128xf32>
    %cst_21 = arith.constant 0.000000e+00 : f32
    %48 = vector.broadcast %cst_21 : f32 to vector<32x128xf32>
    %49 = arith.select %18, %47, %48 : vector<32x128xi1>, vector<32x128xf32>
    %c31_i32 = arith.constant 31 : i32
    %50 = tpu.dynamic_rotate %46 by %c31_i32 dim 0 : vector<32x128xf32>, i32 -> vector<32x128xf32>
    %cst_22 = arith.constant 0.000000e+00 : f32
    %51 = vector.broadcast %cst_22 : f32 to vector<32x128xf32>
    %52 = arith.select %36, %50, %51 : vector<32x128xi1>, vector<32x128xf32>
    %53 = arith.addf %49, %43 : vector<32x128xf32>
    %54 = arith.addf %53, %52 : vector<32x128xf32>
    %c0_23 = arith.constant 0 : index
    %c0_24 = arith.constant 0 : index
    %55 = vector.load %arg3[%c0_23, %c0_24] : memref<4x128xf32, #tpu.memory_space<vmem>>, vector<1x128xf32>
    %c1_25 = arith.constant 1 : index
    %c0_26 = arith.constant 0 : index
    %56 = vector.load %arg3[%c1_25, %c0_26] : memref<4x128xf32, #tpu.memory_space<vmem>>, vector<1x128xf32>
    %cst_27 = arith.constant dense<0.000000e+00> : vector<128xf32>
    %57 = vector.multi_reduction <add>, %54, %cst_27 [0] : vector<32x128xf32> to vector<128xf32>
    %58 = vector.shape_cast %57 : vector<128xf32> to vector<1x128xf32>
    %59 = arith.mulf %54, %54 : vector<32x128xf32>
    %cst_28 = arith.constant dense<0.000000e+00> : vector<128xf32>
    %60 = vector.multi_reduction <add>, %59, %cst_28 [0] : vector<32x128xf32> to vector<128xf32>
    %61 = vector.shape_cast %60 : vector<128xf32> to vector<1x128xf32>
    %62 = tpu.concatenate %58, %61 in 0 : vector<1x128xf32>, vector<1x128xf32> -> vector<2x128xf32>
    %c8_i32 = arith.constant 8 : i32
    %63 = tpu.dynamic_rotate %62 by %c8_i32 dim 1 : vector<2x128xf32>, i32 -> vector<2x128xf32>
    %64 = arith.addf %62, %63 : vector<2x128xf32>
    %c16_i32_29 = arith.constant 16 : i32
    %65 = tpu.dynamic_rotate %64 by %c16_i32_29 dim 1 : vector<2x128xf32>, i32 -> vector<2x128xf32>
    %66 = arith.addf %64, %65 : vector<2x128xf32>
    %c32_i32 = arith.constant 32 : i32
    %67 = tpu.dynamic_rotate %66 by %c32_i32 dim 1 : vector<2x128xf32>, i32 -> vector<2x128xf32>
    %68 = arith.addf %66, %67 : vector<2x128xf32>
    %c64_i32 = arith.constant 64 : i32
    %69 = tpu.dynamic_rotate %68 by %c64_i32 dim 1 : vector<2x128xf32>, i32 -> vector<2x128xf32>
    %70 = arith.addf %68, %69 : vector<2x128xf32>
    %71 = vector.extract_strided_slice %70 {offsets = [0, 0], sizes = [1, 128], strides = [1, 1]} : vector<2x128xf32> to vector<1x128xf32>
    %cst_30 = arith.constant 0.001953125 : f32
    %72 = vector.broadcast %cst_30 : f32 to vector<1x128xf32>
    %73 = arith.mulf %71, %72 : vector<1x128xf32>
    %74 = vector.extract_strided_slice %70 {offsets = [1, 0], sizes = [1, 128], strides = [1, 1]} : vector<2x128xf32> to vector<1x128xf32>
    %cst_31 = arith.constant 0.001953125 : f32
    %75 = vector.broadcast %cst_31 : f32 to vector<1x128xf32>
    %76 = arith.mulf %74, %75 : vector<1x128xf32>
    %77 = arith.mulf %73, %73 : vector<1x128xf32>
    %78 = arith.subf %76, %77 : vector<1x128xf32>
    %cst_32 = arith.constant 9.99999974E-6 : f32
    %79 = vector.broadcast %cst_32 : f32 to vector<1x128xf32>
    %80 = arith.addf %78, %79 : vector<1x128xf32>
    %81 = math.rsqrt %80 : vector<1x128xf32>
    %82 = arith.mulf %55, %81 : vector<1x128xf32>
    %83 = arith.mulf %73, %82 : vector<1x128xf32>
    %84 = arith.subf %56, %83 : vector<1x128xf32>
    %85 = vector.broadcast %82 : vector<1x128xf32> to vector<32x128xf32>
    %86 = arith.mulf %54, %85 : vector<32x128xf32>
    %87 = vector.broadcast %84 : vector<1x128xf32> to vector<32x128xf32>
    %88 = arith.addf %86, %87 : vector<32x128xf32>
    %cst_33 = arith.constant 0.000000e+00 : f32
    %89 = vector.broadcast %cst_33 : f32 to vector<32x128xf32>
    %90 = arith.maximumf %88, %89 : vector<32x128xf32>
    %c0_34 = arith.constant 0 : index
    %c0_35 = arith.constant 0 : index
    %c0_36 = arith.constant 0 : index
    %91 = vector.load %arg2[%c0_34, %c0_35, %c0_36] : memref<3x128x128xf32, #tpu.memory_space<vmem>>, vector<1x128x128xf32>
    %92 = vector.shape_cast %91 : vector<1x128x128xf32> to vector<128x128xf32>
    %cst_37 = arith.constant dense<0.000000e+00> : vector<32x128xf32>
    %93 = tpu.matmul %90, %92, %cst_37 {dimension_numbers = #tpu.dot_dimension_numbers<[1], [0], [0], [1], [0, 0, 1, 1], [], []>} : vector<32x128xf32>, vector<128x128xf32>, vector<32x128xf32> -> vector<32x128xf32>
    %c1_38 = arith.constant 1 : index
    %c0_39 = arith.constant 0 : index
    %c0_40 = arith.constant 0 : index
    %94 = vector.load %arg2[%c1_38, %c0_39, %c0_40] : memref<3x128x128xf32, #tpu.memory_space<vmem>>, vector<1x128x128xf32>
    %95 = vector.shape_cast %94 : vector<1x128x128xf32> to vector<128x128xf32>
    %cst_41 = arith.constant dense<0.000000e+00> : vector<32x128xf32>
    %96 = tpu.matmul %90, %95, %cst_41 {dimension_numbers = #tpu.dot_dimension_numbers<[1], [0], [0], [1], [0, 0, 1, 1], [], []>} : vector<32x128xf32>, vector<128x128xf32>, vector<32x128xf32> -> vector<32x128xf32>
    %c2_42 = arith.constant 2 : index
    %c0_43 = arith.constant 0 : index
    %c0_44 = arith.constant 0 : index
    %97 = vector.load %arg2[%c2_42, %c0_43, %c0_44] : memref<3x128x128xf32, #tpu.memory_space<vmem>>, vector<1x128x128xf32>
    %98 = vector.shape_cast %97 : vector<1x128x128xf32> to vector<128x128xf32>
    %cst_45 = arith.constant dense<0.000000e+00> : vector<32x128xf32>
    %99 = tpu.matmul %90, %98, %cst_45 {dimension_numbers = #tpu.dot_dimension_numbers<[1], [0], [0], [1], [0, 0, 1, 1], [], []>} : vector<32x128xf32>, vector<128x128xf32>, vector<32x128xf32> -> vector<32x128xf32>
    %c1_i32_46 = arith.constant 1 : i32
    %100 = tpu.dynamic_rotate %93 by %c1_i32_46 dim 0 : vector<32x128xf32>, i32 -> vector<32x128xf32>
    %cst_47 = arith.constant 0.000000e+00 : f32
    %101 = vector.broadcast %cst_47 : f32 to vector<32x128xf32>
    %102 = arith.select %18, %100, %101 : vector<32x128xi1>, vector<32x128xf32>
    %c31_i32_48 = arith.constant 31 : i32
    %103 = tpu.dynamic_rotate %99 by %c31_i32_48 dim 0 : vector<32x128xf32>, i32 -> vector<32x128xf32>
    %cst_49 = arith.constant 0.000000e+00 : f32
    %104 = vector.broadcast %cst_49 : f32 to vector<32x128xf32>
    %105 = arith.select %36, %103, %104 : vector<32x128xi1>, vector<32x128xf32>
    %106 = arith.addf %102, %96 : vector<32x128xf32>
    %107 = arith.addf %106, %105 : vector<32x128xf32>
    %c2_50 = arith.constant 2 : index
    %c0_51 = arith.constant 0 : index
    %108 = vector.load %arg3[%c2_50, %c0_51] : memref<4x128xf32, #tpu.memory_space<vmem>>, vector<1x128xf32>
    %c3 = arith.constant 3 : index
    %c0_52 = arith.constant 0 : index
    %109 = vector.load %arg3[%c3, %c0_52] : memref<4x128xf32, #tpu.memory_space<vmem>>, vector<1x128xf32>
    %cst_53 = arith.constant dense<0.000000e+00> : vector<128xf32>
    %110 = vector.multi_reduction <add>, %107, %cst_53 [0] : vector<32x128xf32> to vector<128xf32>
    %111 = vector.shape_cast %110 : vector<128xf32> to vector<1x128xf32>
    %112 = arith.mulf %107, %107 : vector<32x128xf32>
    %cst_54 = arith.constant dense<0.000000e+00> : vector<128xf32>
    %113 = vector.multi_reduction <add>, %112, %cst_54 [0] : vector<32x128xf32> to vector<128xf32>
    %114 = vector.shape_cast %113 : vector<128xf32> to vector<1x128xf32>
    %115 = tpu.concatenate %111, %114 in 0 : vector<1x128xf32>, vector<1x128xf32> -> vector<2x128xf32>
    %c8_i32_55 = arith.constant 8 : i32
    %116 = tpu.dynamic_rotate %115 by %c8_i32_55 dim 1 : vector<2x128xf32>, i32 -> vector<2x128xf32>
    %117 = arith.addf %115, %116 : vector<2x128xf32>
    %c16_i32_56 = arith.constant 16 : i32
    %118 = tpu.dynamic_rotate %117 by %c16_i32_56 dim 1 : vector<2x128xf32>, i32 -> vector<2x128xf32>
    %119 = arith.addf %117, %118 : vector<2x128xf32>
    %c32_i32_57 = arith.constant 32 : i32
    %120 = tpu.dynamic_rotate %119 by %c32_i32_57 dim 1 : vector<2x128xf32>, i32 -> vector<2x128xf32>
    %121 = arith.addf %119, %120 : vector<2x128xf32>
    %c64_i32_58 = arith.constant 64 : i32
    %122 = tpu.dynamic_rotate %121 by %c64_i32_58 dim 1 : vector<2x128xf32>, i32 -> vector<2x128xf32>
    %123 = arith.addf %121, %122 : vector<2x128xf32>
    %124 = vector.extract_strided_slice %123 {offsets = [0, 0], sizes = [1, 128], strides = [1, 1]} : vector<2x128xf32> to vector<1x128xf32>
    %cst_59 = arith.constant 0.001953125 : f32
    %125 = vector.broadcast %cst_59 : f32 to vector<1x128xf32>
    %126 = arith.mulf %124, %125 : vector<1x128xf32>
    %127 = vector.extract_strided_slice %123 {offsets = [1, 0], sizes = [1, 128], strides = [1, 1]} : vector<2x128xf32> to vector<1x128xf32>
    %cst_60 = arith.constant 0.001953125 : f32
    %128 = vector.broadcast %cst_60 : f32 to vector<1x128xf32>
    %129 = arith.mulf %127, %128 : vector<1x128xf32>
    %130 = arith.mulf %126, %126 : vector<1x128xf32>
    %131 = arith.subf %129, %130 : vector<1x128xf32>
    %cst_61 = arith.constant 9.99999974E-6 : f32
    %132 = vector.broadcast %cst_61 : f32 to vector<1x128xf32>
    %133 = arith.addf %131, %132 : vector<1x128xf32>
    %134 = math.rsqrt %133 : vector<1x128xf32>
    %135 = arith.mulf %108, %134 : vector<1x128xf32>
    %136 = arith.mulf %126, %135 : vector<1x128xf32>
    %137 = arith.subf %109, %136 : vector<1x128xf32>
    %138 = vector.broadcast %135 : vector<1x128xf32> to vector<32x128xf32>
    %139 = arith.mulf %107, %138 : vector<32x128xf32>
    %140 = vector.broadcast %137 : vector<1x128xf32> to vector<32x128xf32>
    %141 = arith.addf %139, %140 : vector<32x128xf32>
    %cst_62 = arith.constant 0.000000e+00 : f32
    %142 = vector.broadcast %cst_62 : f32 to vector<32x128xf32>
    %143 = arith.maximumf %141, %142 : vector<32x128xf32>
    %c0_63 = arith.constant 0 : index
    %c0_64 = arith.constant 0 : index
    %144 = vector.load %arg4[%c0_63, %c0_64] : memref<32x128xf32, #tpu.memory_space<vmem>>, vector<32x128xf32>
    tpu.vector_store %arg4[%c0_63, %c0_64], %143 {strides = array<i32>} : memref<32x128xf32, #tpu.memory_space<vmem>>, vector<32x128xf32>,
    return
  }
}

</mosaic_0001>

<llo_original>
// kernel: conv_block_forward.1
$region0: #{conv_block_forward.1}
  #allocation0 [shape = 'u32[]', space=smem, size = 0x4, offset = 0x4, fixed_abs, tag = 'smem constant byte address 0x4 - core index']
  #allocation1 [shape = 'u32[144,128]{1,0:T(1,128)}', space=vmem, size = 0x12000, scoped, tag = 'internal scratch']
  %s0 = inlined_call_operand.vmem [shape: f32[32,64], index: 0, kind: input, shape index: {}]
  %s1 = inlined_call_operand.hbm [shape: f32[3,64,128], index: 1, kind: input, shape index: {}]
  %s2 = inlined_call_operand.vmem [shape: f32[3,128,128], index: 2, kind: input, shape index: {}]
  %s3 = inlined_call_operand.vmem [shape: f32[4,128], index: 3, kind: input, shape index: {}]
  %s4 = inlined_call_operand.vmem [shape: f32[32,128], index: 4, kind: output, shape index: {}]
  %s5 = sld [smem:[#allocation0]]
  $region30: #{conv_block_forward.1} parent=0
    _
  %s7 = ssub.s32 1, %s5
  %s8 = scalar_select 0, %s7, %s5
  $region1: #{conv_block_forward.1} parent=0
    #allocation2 [shape = 'u8[98304]{0}', space=vmem, size = 0x18000, scoped, tag = 'input window, operand 1, single buffered']
    #allocation3 [shape = 's32[1]{0}', space=sflag, size = 0x4, scoped, tag = 'scoped memory for conv_block_forward.1']
    %9 = vsyncpa [#allocation3], 0
    // Predicated region
    $region2: #{conv_block_forward.1} parent=1 // pred_check
      _
    $region3: #{conv_block_forward.1} parent=1 // pred_check_branch
      %11 = sbr.rel (0) target = $region5
    $region4: #{conv_block_forward.1} parent=1 // pred_region
      _
    $region5: #{conv_block_forward.1} parent=1 // pred_fallthru
      _
    // Predicated region
    $region6: #{conv_block_forward.1} parent=1 // pred_check
      _
    $region7: #{conv_block_forward.1} parent=1 // pred_check_branch
      %13 = sbr.rel (0) target = $region9
    $region8: #{conv_block_forward.1} parent=1 // pred_region
      %s15 = ssub.s32 3072, 3072
      %16 = vsyncadd [#allocation3], %s15
      %s17 = sshll.u32 [#allocation2], 4
      %s18 = int_to_ptr.vmem [resolvable:$true] %s17
      %23 = dma.hbm_to_vmem [thread:$0]  %s1, 3072, %s18, [#allocation3], 128, 128, 8
    $region9: #{conv_block_forward.1} parent=1 // pred_fallthru
      _
    // Predicated region
    $region10: #{conv_block_forward.1} parent=1 // pred_check
      _
    $region11: #{conv_block_forward.1} parent=1 // pred_check_branch
      %25 = sbr.rel (0) target = $region13
    $region12: #{conv_block_forward.1} parent=1 // pred_region
      _
    $region13: #{conv_block_forward.1} parent=1 // pred_fallthru
      _
    // Predicated region
    $region14: #{conv_block_forward.1} parent=1 // pred_check
      _
    $region15: #{conv_block_forward.1} parent=1 // pred_check_branch
      %27 = sbr.rel (0) target = $region17
    $region16: #{conv_block_forward.1} parent=1 // pred_region
      _
    $region17: #{conv_block_forward.1} parent=1 // pred_fallthru
      _
    // Predicated region
    $region18: #{conv_block_forward.1} parent=1 // pred_check
      _
    $region19: #{conv_block_forward.1} parent=1 // pred_check_branch
      %29 = sbr.rel (0) target = $region21
    $region20: #{conv_block_forward.1} parent=1 // pred_region
      %30 = dma.done [#allocation3], 3072
    $region21: #{conv_block_forward.1} parent=1 // pred_fallthru
      _
    %v31 = vlaneseq
    %v32 = vshrl.u32 %v31, 7
    %v33 = vadd.s32 %v32, 8
    %v34 = vadd.s32 %v32, 16
    %v35 = vadd.s32 %v32, 24
    %vm36 = vcmp.lt.s32.totalorder %v32, 0
    %v37 = vsub.s32 0, %v32
    %v38 = vsel %vm36, %v37, %v32
    %v39 = vshrl.u32 %v38, 4
    %v40 = vand.u32 %v38, 15
    %v41 = vsub.s32 0, %v40
    %v42 = vsel %vm36, %v41, %v40
    %vm43 = vcmp.lt.s32.totalorder %v33, 0
    %v44 = vsub.s32 0, %v33
    %v45 = vsel %vm43, %v44, %v33
    %v46 = vshrl.u32 %v45, 4
    %v47 = vand.u32 %v45, 15
    %v48 = vsub.s32 0, %v47
    %v49 = vsel %vm43, %v48, %v47
    %vm50 = vcmp.lt.s32.totalorder %v34, 0
    %v51 = vsub.s32 0, %v34
    %v52 = vsel %vm50, %v51, %v34
    %v53 = vshrl.u32 %v52, 4
    %v54 = vand.u32 %v52, 15
    %v55 = vsub.s32 0, %v54
    %v56 = vsel %vm50, %v55, %v54
    %vm57 = vcmp.lt.s32.totalorder %v35, 0
    %v58 = vsub.s32 0, %v35
    %v59 = vsel %vm57, %v58, %v35
    %v60 = vshrl.u32 %v59, 4
    %v61 = vand.u32 %v59, 15
    %v62 = vsub.s32 0, %v61
    %v63 = vsel %vm57, %v62, %v61
    %vm64 = vcmp.ne.s32.totalorder %v42, 0
    %vm65 = vcmp.ne.s32.totalorder %v49, 0
    %vm66 = vcmp.ne.s32.totalorder %v56, 0
    %vm67 = vcmp.ne.s32.totalorder %v63, 0
    %vm68 = vcmp.lt.s32.totalorder %v42, 0
    %vm69 = vcmp.lt.s32.totalorder %v49, 0
    %vm70 = vcmp.lt.s32.totalorder %v56, 0
    %vm71 = vcmp.lt.s32.totalorder %v63, 0
    %vm72 = vmand %vm68, %vm64
    %vm73 = vmand %vm69, %vm65
    %vm74 = vmand %vm70, %vm66
    %vm75 = vmand %vm71, %vm67
    %v76 = vadd.s32 %v42, 16
    %v77 = vadd.s32 %v49, 16
    %v78 = vadd.s32 %v56, 16
    %v79 = vadd.s32 %v63, 16
    %v80 = vsel %vm72, %v76, %v42
    %v81 = vsel %vm73, %v77, %v49
    %v82 = vsel %vm74, %v78, %v56
    %v83 = vsel %vm75, %v79, %v63
    %vm84 = vcmp.ne.s32.totalorder %v80, 0
    %vm85 = vcmp.ne.s32.totalorder %v81, 0
    %vm86 = vcmp.ne.s32.totalorder %v82, 0
    %vm87 = vcmp.ne.s32.totalorder %v83, 0
    %vm88 = vcmp.ne.s32.totalorder %v80, 15
    %vm89 = vcmp.ne.s32.totalorder %v81, 15
    %vm90 = vcmp.ne.s32.totalorder %v82, 15
    %vm91 = vcmp.ne.s32.totalorder %v83, 15
    %v92 = vld [vmem:[%s0] sm:$0xff]
    %v93 = vld [vmem:[%s0 + $0x8] sm:$0xff]
    %v94 = vld [vmem:[%s0 + $0x10] sm:$0xff]
    %v95 = vld [vmem:[%s0 + $0x18] sm:$0xff]
    %v96 = vld [vmem:[#allocation2] sm:$0xff]
    %v97 = vld [vmem:[#allocation2 + $0x8] sm:$0xff]
    %v98 = vld [vmem:[#allocation2 + $0x10] sm:$0xff]
    %v99 = vld [vmem:[#allocation2 + $0x18] sm:$0xff]
    %v100 = vld [vmem:[#allocation2 + $0x20] sm:$0xff]
    %v101 = vld [vmem:[#allocation2 + $0x28] sm:$0xff]
    %v102 = vld [vmem:[#allocation2 + $0x30] sm:$0xff]
    %v103 = vld [vmem:[#allocation2 + $0x38] sm:$0xff]
    %vm104 = vcmask 523264
    %v106 = vsel %vm104, %v92, 0
    %v109 = vsel %vm104, %v93, 0
    %v112 = vsel %vm104, %v94, 0
    %v115 = vsel %vm104, %v95, 0
    %117 = vmatprep.subr.mxu0 0.0
    %118 = vmatpush1.msra.mxu0 0.0
    %119 = vmatprep.subr.mxu0 0.0
    %120 = vmatpush1.msra.mxu0 0.0
    %121 = vmatprep.subr.mxu0 0.0
    %122 = vmatpush1.msra.mxu0 0.0
    %123 = vmatprep.subr.mxu0 0.0
    %124 = vmatpush1.msra.mxu0 0.0
    %125 = vmatprep.subr.mxu0 0.0
    %126 = vmatpush1.msra.mxu0 0.0
    %127 = vmatprep.subr.mxu0 0.0
    %128 = vmatpush1.msra.mxu0 0.0
    %129 = vmatprep.subr.mxu0 0.0
    %130 = vmatpush1.msra.mxu0 0.0
    %131 = vmatprep.subr.mxu0 0.0
    %132 = vmatpush1.msra.mxu0 0.0
    %133 = vmatprep.subr.mxu0 0.0
    %134 = vmatpush1.msra.mxu0 %v103
    %135 = vmatprep.subr.mxu0 0.0
    %136 = vmatpush1.msra.mxu0 %v102
    %137 = vmatprep.subr.mxu0 0.0
    %138 = vmatpush1.msra.mxu0 %v101
    %139 = vmatprep.subr.mxu0 0.0
    %140 = vmatpush1.msra.mxu0 %v100
    %141 = vmatprep.subr.mxu0 0.0
    %142 = vmatpush1.msra.mxu0 %v99
    %143 = vmatprep.subr.mxu0 0.0
    %144 = vmatpush1.msra.mxu0 %v98
    %145 = vmatprep.subr.mxu0 0.0
    %146 = vmatpush1.msra.mxu0 %v97
    %147 = vmatprep.subr.mxu0 0.0
    %148 = vmatpush1.msra.mxu0 %v96
    %149 = vmatprep.subr.mxu0 0.0
    %150 = vmatpush2.msra.mxu0 0.0
    %151 = vmatprep.subr.mxu0 0.0
    %152 = vmatpush2.msra.mxu0 0.0
    %153 = vmatprep.subr.mxu0 0.0
    %154 = vmatpush2.msra.mxu0 0.0
    %155 = vmatprep.subr.mxu0 0.0
    %156 = vmatpush2.msra.mxu0 0.0
    %157 = vmatprep.subr.mxu0 0.0
    %158 = vmatpush2.msra.mxu0 0.0
    %159 = vmatprep.subr.mxu0 0.0
    %160 = vmatpush2.msra.mxu0 0.0
    %161 = vmatprep.subr.mxu0 0.0
    %162 = vmatpush2.msra.mxu0 0.0
    %163 = vmatprep.subr.mxu0 0.0
    %164 = vmatpush2.msra.mxu0 0.0
    %165 = vmatprep.subr.mxu0 0.0
    %166 = vmatpush2.msra.mxu0 0.0
    %167 = vmatprep.subr.mxu0 0.0
    %168 = vmatpush2.msra.mxu0 0.0
    %169 = vmatprep.subr.mxu0 0.0
    %170 = vmatpush2.msra.mxu0 0.0
    %171 = vmatprep.subr.mxu0 0.0
    %172 = vmatpush2.msra.mxu0 0.0
    %173 = vmatprep.subr.mxu0 0.0
    %174 = vmatpush2.msra.mxu0 0.0
    %175 = vmatprep.subr.mxu0 0.0
    %176 = vmatpush2.msra.mxu0 0.0
    %177 = vmatprep.subr.mxu0 0.0
    %178 = vmatpush2.msra.mxu0 0.0
    %179 = vmatprep.subr.mxu0 0.0
    %180 = vmatpush2.msra.mxu0 0.0
    %181 = vmatprep.mubr.f32.mxu0 0.0
    %182 = vmatmul.mubr.f32.gmra.mxu0 %v106
    %v183 = vpop.f32.mrf.mxu0
    %v184 = vadd.f32 0.0, %v183
    %v185 = vpop.f32.mrf.mxu0
    %186 = vmatprep.mubr.f32.mxu0 0.0
    %187 = vmatmul.mubr.f32.gmra.mxu0 %v109
    %v188 = vpop.f32.mrf.mxu0
    %v189 = vadd.f32 0.0, %v188
    %v190 = vpop.f32.mrf.mxu0
    %191 = vmatprep.mubr.f32.mxu0 0.0
    %192 = vmatmul.mubr.f32.gmra.mxu0 %v112
    %v193 = vpop.f32.mrf.mxu0
    %v194 = vadd.f32 0.0, %v193
    %v195 = vpop.f32.mrf.mxu0
    %196 = vmatprep.mubr.f32.mxu0 0.0
    %197 = vmatmul.mubr.f32.gmra.mxu0 %v115
    %v198 = vpop.f32.mrf.mxu0
    %v199 = vadd.f32 0.0, %v198
    %v200 = vpop.f32.mrf.mxu0
    %201 = vdwg.mxu0
    %s202 = scalar_lea.vmem [#allocation2], 64
    %v203 = vld [vmem:[%s202] sm:$0xff]
    %v204 = vld [vmem:[%s202 + $0x8] sm:$0xff]
    %v205 = vld [vmem:[%s202 + $0x10] sm:$0xff]
    %v206 = vld [vmem:[%s202 + $0x18] sm:$0xff]
    %v207 = vld [vmem:[%s202 + $0x20] sm:$0xff]
    %v208 = vld [vmem:[%s202 + $0x28] sm:$0xff]
    %v209 = vld [vmem:[%s202 + $0x30] sm:$0xff]
    %v210 = vld [vmem:[%s202 + $0x38] sm:$0xff]
    %211 = vmatprep.subr.mxu0 0.0
    %212 = vmatpush1.msra.mxu0 0.0
    %213 = vmatprep.subr.mxu0 0.0
    %214 = vmatpush1.msra.mxu0 0.0
    %215 = vmatprep.subr.mxu0 0.0
    %216 = vmatpush1.msra.mxu0 0.0
    %217 = vmatprep.subr.mxu0 0.0
    %218 = vmatpush1.msra.mxu0 0.0
    %219 = vmatprep.subr.mxu0 0.0
    %220 = vmatpush1.msra.mxu0 0.0
    %221 = vmatprep.subr.mxu0 0.0
    %222 = vmatpush1.msra.mxu0 0.0
    %223 = vmatprep.subr.mxu0 0.0
    %224 = vmatpush1.msra.mxu0 0.0
    %225 = vmatprep.subr.mxu0 0.0
    %226 = vmatpush1.msra.mxu0 0.0
    %227 = vmatprep.subr.mxu0 0.0
    %228 = vmatpush1.msra.mxu0 %v210
    %229 = vmatprep.subr.mxu0 0.0
    %230 = vmatpush1.msra.mxu0 %v209
    %231 = vmatprep.subr.mxu0 0.0
    %232 = vmatpush1.msra.mxu0 %v208
    %233 = vmatprep.subr.mxu0 0.0
    %234 = vmatpush1.msra.mxu0 %v207
    %235 = vmatprep.subr.mxu0 0.0
    %236 = vmatpush1.msra.mxu0 %v206
    %237 = vmatprep.subr.mxu0 0.0
    %238 = vmatpush1.msra.mxu0 %v205
    %239 = vmatprep.subr.mxu0 0.0
    %240 = vmatpush1.msra.mxu0 %v204
    %241 = vmatprep.subr.mxu0 0.0
    %242 = vmatpush1.msra.mxu0 %v203
    %243 = vmatprep.subr.mxu0 0.0
    %244 = vmatpush2.msra.mxu0 0.0
    %245 = vmatprep.subr.mxu0 0.0
    %246 = vmatpush2.msra.mxu0 0.0
    %247 = vmatprep.subr.mxu0 0.0
    %248 = vmatpush2.msra.mxu0 0.0
    %249 = vmatprep.subr.mxu0 0.0
    %250 = vmatpush2.msra.mxu0 0.0
    %251 = vmatprep.subr.mxu0 0.0
    %252 = vmatpush2.msra.mxu0 0.0
    %253 = vmatprep.subr.mxu0 0.0
    %254 = vmatpush2.msra.mxu0 0.0
    %255 = vmatprep.subr.mxu0 0.0
    %256 = vmatpush2.msra.mxu0 0.0
    %257 = vmatprep.subr.mxu0 0.0
    %258 = vmatpush2.msra.mxu0 0.0
    %259 = vmatprep.subr.mxu0 0.0
    %260 = vmatpush2.msra.mxu0 0.0
    %261 = vmatprep.subr.mxu0 0.0
    %262 = vmatpush2.msra.mxu0 0.0
    %263 = vmatprep.subr.mxu0 0.0
    %264 = vmatpush2.msra.mxu0 0.0
    %265 = vmatprep.subr.mxu0 0.0
    %266 = vmatpush2.msra.mxu0 0.0
    %267 = vmatprep.subr.mxu0 0.0
    %268 = vmatpush2.msra.mxu0 0.0
    %269 = vmatprep.subr.mxu0 0.0
    %270 = vmatpush2.msra.mxu0 0.0
    %271 = vmatprep.subr.mxu0 0.0
    %272 = vmatpush2.msra.mxu0 0.0
    %273 = vmatprep.subr.mxu0 0.0
    %274 = vmatpush2.msra.mxu0 0.0
    %275 = vmatprep.mubr.f32.mxu0 0.0
    %276 = vmatmul.mubr.f32.gmra.mxu0 %v106
    %v277 = vpop.f32.mrf.mxu0
    %v278 = vadd.f32 0.0, %v277
    %v279 = vpop.f32.mrf.mxu0
    %280 = vmatprep.mubr.f32.mxu0 0.0
    %281 = vmatmul.mubr.f32.gmra.mxu0 %v109
    %v282 = vpop.f32.mrf.mxu0
    %v283 = vadd.f32 0.0, %v282
    %v284 = vpop.f32.mrf.mxu0
    %285 = vmatprep.mubr.f32.mxu0 0.0
    %286 = vmatmul.mubr.f32.gmra.mxu0 %v112
    %v287 = vpop.f32.mrf.mxu0
    %v288 = vadd.f32 0.0, %v287
    %v289 = vpop.f32.mrf.mxu0
    %290 = vmatprep.mubr.f32.mxu0 0.0
    %291 = vmatmul.mubr.f32.gmra.mxu0 %v115
    %v292 = vpop.f32.mrf.mxu0
    %v293 = vadd.f32 0.0, %v292
    %v294 = vpop.f32.mrf.mxu0
    %295 = vdwg.mxu0
    %s296 = scalar_lea.vmem [#allocation2], 128
    %v297 = vld [vmem:[%s296] sm:$0xff]
    %v298 = vld [vmem:[%s296 + $0x8] sm:$0xff]
    %v299 = vld [vmem:[%s296 + $0x10] sm:$0xff]
    %v300 = vld [vmem:[%s296 + $0x18] sm:$0xff]
    %v301 = vld [vmem:[%s296 + $0x20] sm:$0xff]
    %v302 = vld [vmem:[%s296 + $0x28] sm:$0xff]
    %v303 = vld [vmem:[%s296 + $0x30] sm:$0xff]
    %v304 = vld [vmem:[%s296 + $0x38] sm:$0xff]
    %305 = vmatprep.subr.mxu0 0.0
    %306 = vmatpush1.msra.mxu0 0.0
    %307 = vmatprep.subr.mxu0 0.0
    %308 = vmatpush1.msra.mxu0 0.0
    %309 = vmatprep.subr.mxu0 0.0
    %310 = vmatpush1.msra.mxu0 0.0
    %311 = vmatprep.subr.mxu0 0.0
    %312 = vmatpush1.msra.mxu0 0.0
    %313 = vmatprep.subr.mxu0 0.0
    %314 = vmatpush1.msra.mxu0 0.0
    %315 = vmatprep.subr.mxu0 0.0
    %316 = vmatpush1.msra.mxu0 0.0
    %317 = vmatprep.subr.mxu0 0.0
    %318 = vmatpush1.msra.mxu0 0.0
    %319 = vmatprep.subr.mxu0 0.0
    %320 = vmatpush1.msra.mxu0 0.0
    %321 = vmatprep.subr.mxu0 0.0
    %322 = vmatpush1.msra.mxu0 %v304
    %323 = vmatprep.subr.mxu0 0.0
    %324 = vmatpush1.msra.mxu0 %v303
    %325 = vmatprep.subr.mxu0 0.0
    %326 = vmatpush1.msra.mxu0 %v302
    %327 = vmatprep.subr.mxu0 0.0
    %328 = vmatpush1.msra.mxu0 %v301
    %329 = vmatprep.subr.mxu0 0.0
    %330 = vmatpush1.msra.mxu0 %v300
    %331 = vmatprep.subr.mxu0 0.0
    %332 = vmatpush1.msra.mxu0 %v299
    %333 = vmatprep.subr.mxu0 0.0
    %334 = vmatpush1.msra.mxu0 %v298
    %335 = vmatprep.subr.mxu0 0.0
    %336 = vmatpush1.msra.mxu0 %v297
    %337 = vmatprep.subr.mxu0 0.0
    %338 = vmatpush2.msra.mxu0 0.0
    %339 = vmatprep.subr.mxu0 0.0
    %340 = vmatpush2.msra.mxu0 0.0
    %341 = vmatprep.subr.mxu0 0.0
    %342 = vmatpush2.msra.mxu0 0.0
    %343 = vmatprep.subr.mxu0 0.0
    %344 = vmatpush2.msra.mxu0 0.0
    %345 = vmatprep.subr.mxu0 0.0
    %346 = vmatpush2.msra.mxu0 0.0
    %347 = vmatprep.subr.mxu0 0.0
    %348 = vmatpush2.msra.mxu0 0.0
    %349 = vmatprep.subr.mxu0 0.0
    %350 = vmatpush2.msra.mxu0 0.0
    %351 = vmatprep.subr.mxu0 0.0
    %352 = vmatpush2.msra.mxu0 0.0
    %353 = vmatprep.subr.mxu0 0.0
    %354 = vmatpush2.msra.mxu0 0.0
    %355 = vmatprep.subr.mxu0 0.0
    %356 = vmatpush2.msra.mxu0 0.0
    %357 = vmatprep.subr.mxu0 0.0
    %358 = vmatpush2.msra.mxu0 0.0
    %359 = vmatprep.subr.mxu0 0.0
    %360 = vmatpush2.msra.mxu0 0.0
    %361 = vmatprep.subr.mxu0 0.0
    %362 = vmatpush2.msra.mxu0 0.0
    %363 = vmatprep.subr.mxu0 0.0
    %364 = vmatpush2.msra.mxu0 0.0
    %365 = vmatprep.subr.mxu0 0.0
    %366 = vmatpush2.msra.mxu0 0.0
    %367 = vmatprep.subr.mxu0 0.0
    %368 = vmatpush2.msra.mxu0 0.0
    %369 = vmatprep.mubr.f32.mxu0 0.0
    %370 = vmatmul.mubr.f32.gmra.mxu0 %v106
    %v371 = vpop.f32.mrf.mxu0
    %v372 = vadd.f32 0.0, %v371
    %v373 = vpop.f32.mrf.mxu0
    %374 = vmatprep.mubr.f32.mxu0 0.0
    %375 = vmatmul.mubr.f32.gmra.mxu0 %v109
    %v376 = vpop.f32.mrf.mxu0
    %v377 = vadd.f32 0.0, %v376
    %v378 = vpop.f32.mrf.mxu0
    %379 = vmatprep.mubr.f32.mxu0 0.0
    %380 = vmatmul.mubr.f32.gmra.mxu0 %v112
    %v381 = vpop.f32.mrf.mxu0
    %v382 = vadd.f32 0.0, %v381
    %v383 = vpop.f32.mrf.mxu0
    %384 = vmatprep.mubr.f32.mxu0 0.0
    %385 = vmatmul.mubr.f32.gmra.mxu0 %v115
    %v386 = vpop.f32.mrf.mxu0
    %v387 = vadd.f32 0.0, %v386
    %v388 = vpop.f32.mrf.mxu0
    %389 = vdwg.mxu0
    %v390 = vrot.slane %v184, 7
    %v391 = vrot.slane %v189, 7
    %v392 = vrot.slane %v194, 7
    %v393 = vrot.slane %v199, 7
    %vm394 = vcmp.lt.s32.totalorder %v32, 1
    %v395 = vsel %vm394, %v392, %v393
    %v396 = vsel %vm394, %v391, %v392
    %v397 = vsel %vm394, %v390, %v391
    %v398 = vsel %vm394, %v393, %v390
    %v399 = vsel %vm84, %v398, 0.0
    %v400 = vsel %vm85, %v397, 0.0
    %v401 = vsel %vm86, %v396, 0.0
    %v402 = vsel %vm87, %v395, 0.0
    %v403 = vrot.slane %v372, 1
    %v404 = vrot.slane %v377, 1
    %v405 = vrot.slane %v382, 1
    %v406 = vrot.slane %v387, 1
    %vm407 = vcmp.lt.s32.totalorder %v32, 7
    %v408 = vsel %vm407, %v405, %v406
    %v409 = vsel %vm407, %v404, %v405
    %v410 = vsel %vm407, %v403, %v404
    %v411 = vsel %vm407, %v406, %v403
    %v412 = vsel %vm88, %v410, 0.0
    %v413 = vsel %vm89, %v409, 0.0
    %v414 = vsel %vm90, %v408, 0.0
    %v415 = vsel %vm91, %v411, 0.0
    %v416 = vadd.f32 %v399, %v278
    %v417 = vadd.f32 %v400, %v283
    %v418 = vadd.f32 %v401, %v288
    %v419 = vadd.f32 %v402, %v293
    %v420 = vadd.f32 %v416, %v412
    %v421 = vadd.f32 %v417, %v413
    %v422 = vadd.f32 %v418, %v414
    %v423 = vadd.f32 %v419, %v415
    %v424 = vld [vmem:[%s3] sm:$0x1]
    %v425 = vld [vmem:[%s3 + $0x1] sm:$0x1]
    %v426 = vadd.f32 %v420, %v421
    %v427 = vadd.f32 %v426, %v422
    %v428 = vadd.f32 %v427, %v423
    %v429 = vrot.slane %v428, 4
    %v430 = vadd.f32 %v428, %v429
    %v431 = vrot.slane %v430, 2
    %v432 = vadd.f32 %v430, %v431
    %v433 = vrot.slane %v432, 1
    %v434 = vadd.f32 %v432, %v433
    %v435 = vmul.f32 %v420, %v420
    %v436 = vmul.f32 %v421, %v421
    %v437 = vmul.f32 %v422, %v422
    %v438 = vmul.f32 %v423, %v423
    %v439 = vadd.f32 %v435, %v436
    %v440 = vadd.f32 %v439, %v437
    %v441 = vadd.f32 %v440, %v438
    %v442 = vrot.slane %v441, 4
    %v443 = vadd.f32 %v441, %v442
    %v444 = vrot.slane %v443, 2
    %v445 = vadd.f32 %v443, %v444
    %v446 = vrot.slane %v445, 1
    %v447 = vadd.f32 %v445, %v446
    %vm448 = vcmask 1040384
    %v449 = vsel %vm448, %v434, %v447
    %450 = vrot.lane.b32.xlu0 %v449, 8
    %v451 = vpop.permute.xlu0 %450
    %v452 = vadd.f32 %v449, %v451
    %453 = vrot.lane.b32.xlu0 %v452, 16
    %v454 = vpop.permute.xlu0 %453
    %v455 = vadd.f32 %v452, %v454
    %456 = vrot.lane.b32.xlu0 %v455, 32
    %v457 = vpop.permute.xlu0 %456
    %v458 = vadd.f32 %v455, %v457
    %459 = vrot.lane.b32.xlu0 %v458, 64
    %v460 = vpop.permute.xlu0 %459
    %v461 = vadd.f32 %v458, %v460
    %v462 = vmul.f32 %v461, 0.001953125
    %v463 = vmul.f32 %v462, %v462
    %v465 = vrot.slane %v463, 7
    %v467 = vsub.f32 %v462, %v465
    %v468 = vadd.f32 %v467, 1e-05
    %v469 = vrsqrt.pop %v468
    %v471 = vrot.slane %v469, 1
    %v473 = vmul.f32 %v424, %v471
    %v474 = vmul.f32 %v462, %v473
    %v475 = vsub.f32 %v425, %v474
    %v476 = vlaneseq
    %v477 = vshrl.u32 %v476, 7
    %v478 = vsub.s32 0, %v477
    %v479 = vrot.slane %v473, %v478
    %v480 = vmul.f32 %v420, %v479
    %v481 = vmul.f32 %v421, %v479
    %v482 = vmul.f32 %v422, %v479
    %v483 = vmul.f32 %v423, %v479
    %v484 = vlaneseq
    %v485 = vshrl.u32 %v484, 7
    %v486 = vsub.s32 0, %v485
    %v487 = vrot.slane %v475, %v486
    %v488 = vadd.f32 %v480, %v487
    %v489 = vadd.f32 %v481, %v487
    %v490 = vadd.f32 %v482, %v487
    %v491 = vadd.f32 %v483, %v487
    %v492 = vmax.f32 %v488, 0.0
    %v493 = vmax.f32 %v489, 0.0
    %v494 = vmax.f32 %v490, 0.0
    %v495 = vmax.f32 %v491, 0.0
    %v496 = vld [vmem:[%s2] sm:$0xff]
    %v497 = vld [vmem:[%s2 + $0x8] sm:$0xff]
    %v498 = vld [vmem:[%s2 + $0x10] sm:$0xff]
    %v499 = vld [vmem:[%s2 + $0x18] sm:$0xff]
    %v500 = vld [vmem:[%s2 + $0x20] sm:$0xff]
    %v501 = vld [vmem:[%s2 + $0x28] sm:$0xff]
    %v502 = vld [vmem:[%s2 + $0x30] sm:$0xff]
    %v503 = vld [vmem:[%s2 + $0x38] sm:$0xff]
    %v504 = vld [vmem:[%s2 + $0x40] sm:$0xff]
    %v505 = vld [vmem:[%s2 + $0x48] sm:$0xff]
    %v506 = vld [vmem:[%s2 + $0x50] sm:$0xff]
    %v507 = vld [vmem:[%s2 + $0x58] sm:$0xff]
    %v508 = vld [vmem:[%s2 + $0x60] sm:$0xff]
    %v509 = vld [vmem:[%s2 + $0x68] sm:$0xff]
    %v510 = vld [vmem:[%s2 + $0x70] sm:$0xff]
    %v511 = vld [vmem:[%s2 + $0x78] sm:$0xff]
    %512 = vmatprep.subr.mxu0 0.0
    %513 = vmatpush1.msra.mxu0 %v511
    %514 = vmatprep.subr.mxu0 0.0
    %515 = vmatpush1.msra.mxu0 %v510
    %516 = vmatprep.subr.mxu0 0.0
    %517 = vmatpush1.msra.mxu0 %v509
    %518 = vmatprep.subr.mxu0 0.0
    %519 = vmatpush1.msra.mxu0 %v508
    %520 = vmatprep.subr.mxu0 0.0
    %521 = vmatpush1.msra.mxu0 %v507
    %522 = vmatprep.subr.mxu0 0.0
    %523 = vmatpush1.msra.mxu0 %v506
    %524 = vmatprep.subr.mxu0 0.0
    %525 = vmatpush1.msra.mxu0 %v505
    %526 = vmatprep.subr.mxu0 0.0
    %527 = vmatpush1.msra.mxu0 %v504
    %528 = vmatprep.subr.mxu0 0.0
    %529 = vmatpush1.msra.mxu0 %v503
    %530 = vmatprep.subr.mxu0 0.0
    %531 = vmatpush1.msra.mxu0 %v502
    %532 = vmatprep.subr.mxu0 0.0
    %533 = vmatpush1.msra.mxu0 %v501
    %534 = vmatprep.subr.mxu0 0.0
    %535 = vmatpush1.msra.mxu0 %v500
    %536 = vmatprep.subr.mxu0 0.0
    %537 = vmatpush1.msra.mxu0 %v499
    %538 = vmatprep.subr.mxu0 0.0
    %539 = vmatpush1.msra.mxu0 %v498
    %540 = vmatprep.subr.mxu0 0.0
    %541 = vmatpush1.msra.mxu0 %v497
    %542 = vmatprep.subr.mxu0 0.0
    %543 = vmatpush1.msra.mxu0 %v496
    %544 = vmatprep.subr.mxu0 0.0
    %545 = vmatpush2.msra.mxu0 0.0
    %546 = vmatprep.subr.mxu0 0.0
    %547 = vmatpush2.msra.mxu0 0.0
    %548 = vmatprep.subr.mxu0 0.0
    %549 = vmatpush2.msra.mxu0 0.0
    %550 = vmatprep.subr.mxu0 0.0
    %551 = vmatpush2.msra.mxu0 0.0
    %552 = vmatprep.subr.mxu0 0.0
    %553 = vmatpush2.msra.mxu0 0.0
    %554 = vmatprep.subr.mxu0 0.0
    %555 = vmatpush2.msra.mxu0 0.0
    %556 = vmatprep.subr.mxu0 0.0
    %557 = vmatpush2.msra.mxu0 0.0
    %558 = vmatprep.subr.mxu0 0.0
    %559 = vmatpush2.msra.mxu0 0.0
    %560 = vmatprep.subr.mxu0 0.0
    %561 = vmatpush2.msra.mxu0 0.0
    %562 = vmatprep.subr.mxu0 0.0
    %563 = vmatpush2.msra.mxu0 0.0
    %564 = vmatprep.subr.mxu0 0.0
    %565 = vmatpush2.msra.mxu0 0.0
    %566 = vmatprep.subr.mxu0 0.0
    %567 = vmatpush2.msra.mxu0 0.0
    %568 = vmatprep.subr.mxu0 0.0
    %569 = vmatpush2.msra.mxu0 0.0
    %570 = vmatprep.subr.mxu0 0.0
    %571 = vmatpush2.msra.mxu0 0.0
    %572 = vmatprep.subr.mxu0 0.0
    %573 = vmatpush2.msra.mxu0 0.0
    %574 = vmatprep.subr.mxu0 0.0
    %575 = vmatpush2.msra.mxu0 0.0
    %576 = vmatprep.mubr.f32.mxu0 0.0
    %577 = vmatmul.mubr.f32.gmra.mxu0 %v492
    %v578 = vpop.f32.mrf.mxu0
    %v579 = vadd.f32 0.0, %v578
    %v580 = vpop.f32.mrf.mxu0
    %581 = vmatprep.mubr.f32.mxu0 0.0
    %582 = vmatmul.mubr.f32.gmra.mxu0 %v493
    %v583 = vpop.f32.mrf.mxu0
    %v584 = vadd.f32 0.0, %v583
    %v585 = vpop.f32.mrf.mxu0
    %586 = vmatprep.mubr.f32.mxu0 0.0
    %587 = vmatmul.mubr.f32.gmra.mxu0 %v494
    %v588 = vpop.f32.mrf.mxu0
    %v589 = vadd.f32 0.0, %v588
    %v590 = vpop.f32.mrf.mxu0
    %591 = vmatprep.mubr.f32.mxu0 0.0
    %592 = vmatmul.mubr.f32.gmra.mxu0 %v495
    %v593 = vpop.f32.mrf.mxu0
    %v594 = vadd.f32 0.0, %v593
    %v595 = vpop.f32.mrf.mxu0
    %596 = vdwg.mxu0
    %s597 = scalar_lea.vmem %s2, 128
    %v598 = vld [vmem:[%s597] sm:$0xff]
    %v599 = vld [vmem:[%s597 + $0x8] sm:$0xff]
    %v600 = vld [vmem:[%s597 + $0x10] sm:$0xff]
    %v601 = vld [vmem:[%s597 + $0x18] sm:$0xff]
    %v602 = vld [vmem:[%s597 + $0x20] sm:$0xff]
    %v603 = vld [vmem:[%s597 + $0x28] sm:$0xff]
    %v604 = vld [vmem:[%s597 + $0x30] sm:$0xff]
    %v605 = vld [vmem:[%s597 + $0x38] sm:$0xff]
    %v606 = vld [vmem:[%s597 + $0x40] sm:$0xff]
    %v607 = vld [vmem:[%s597 + $0x48] sm:$0xff]
    %v608 = vld [vmem:[%s597 + $0x50] sm:$0xff]
    %v609 = vld [vmem:[%s597 + $0x58] sm:$0xff]
    %v610 = vld [vmem:[%s597 + $0x60] sm:$0xff]
    %v611 = vld [vmem:[%s597 + $0x68] sm:$0xff]
    %v612 = vld [vmem:[%s597 + $0x70] sm:$0xff]
    %v613 = vld [vmem:[%s597 + $0x78] sm:$0xff]
    %614 = vmatprep.subr.mxu0 0.0
    %615 = vmatpush1.msra.mxu0 %v613
    %616 = vmatprep.subr.mxu0 0.0
    %617 = vmatpush1.msra.mxu0 %v612
    %618 = vmatprep.subr.mxu0 0.0
    %619 = vmatpush1.msra.mxu0 %v611
    %620 = vmatprep.subr.mxu0 0.0
    %621 = vmatpush1.msra.mxu0 %v610
    %622 = vmatprep.subr.mxu0 0.0
    %623 = vmatpush1.msra.mxu0 %v609
    %624 = vmatprep.subr.mxu0 0.0
    %625 = vmatpush1.msra.mxu0 %v608
    %626 = vmatprep.subr.mxu0 0.0
    %627 = vmatpush1.msra.mxu0 %v607
    %628 = vmatprep.subr.mxu0 0.0
    %629 = vmatpush1.msra.mxu0 %v606
    %630 = vmatprep.subr.mxu0 0.0
    %631 = vmatpush1.msra.mxu0 %v605
    %632 = vmatprep.subr.mxu0 0.0
    %633 = vmatpush1.msra.mxu0 %v604
    %634 = vmatprep.subr.mxu0 0.0
    %635 = vmatpush1.msra.mxu0 %v603
    %636 = vmatprep.subr.mxu0 0.0
    %637 = vmatpush1.msra.mxu0 %v602
    %638 = vmatprep.subr.mxu0 0.0
    %639 = vmatpush1.msra.mxu0 %v601
    %640 = vmatprep.subr.mxu0 0.0
    %641 = vmatpush1.msra.mxu0 %v600
    %642 = vmatprep.subr.mxu0 0.0
    %643 = vmatpush1.msra.mxu0 %v599
    %644 = vmatprep.subr.mxu0 0.0
    %645 = vmatpush1.msra.mxu0 %v598
    %646 = vmatprep.subr.mxu0 0.0
    %647 = vmatpush2.msra.mxu0 0.0
    %648 = vmatprep.subr.mxu0 0.0
    %649 = vmatpush2.msra.mxu0 0.0
    %650 = vmatprep.subr.mxu0 0.0
    %651 = vmatpush2.msra.mxu0 0.0
    %652 = vmatprep.subr.mxu0 0.0
    %653 = vmatpush2.msra.mxu0 0.0
    %654 = vmatprep.subr.mxu0 0.0
    %655 = vmatpush2.msra.mxu0 0.0
    %656 = vmatprep.subr.mxu0 0.0
    %657 = vmatpush2.msra.mxu0 0.0
    %658 = vmatprep.subr.mxu0 0.0
    %659 = vmatpush2.msra.mxu0 0.0
    %660 = vmatprep.subr.mxu0 0.0
    %661 = vmatpush2.msra.mxu0 0.0
    %662 = vmatprep.subr.mxu0 0.0
    %663 = vmatpush2.msra.mxu0 0.0
    %664 = vmatprep.subr.mxu0 0.0
    %665 = vmatpush2.msra.mxu0 0.0
    %666 = vmatprep.subr.mxu0 0.0
    %667 = vmatpush2.msra.mxu0 0.0
    %668 = vmatprep.subr.mxu0 0.0
    %669 = vmatpush2.msra.mxu0 0.0
    %670 = vmatprep.subr.mxu0 0.0
    %671 = vmatpush2.msra.mxu0 0.0
    %672 = vmatprep.subr.mxu0 0.0
    %673 = vmatpush2.msra.mxu0 0.0
    %674 = vmatprep.subr.mxu0 0.0
    %675 = vmatpush2.msra.mxu0 0.0
    %676 = vmatprep.subr.mxu0 0.0
    %677 = vmatpush2.msra.mxu0 0.0
    %678 = vmatprep.mubr.f32.mxu0 0.0
    %679 = vmatmul.mubr.f32.gmra.mxu0 %v492
    %v680 = vpop.f32.mrf.mxu0
    %v681 = vadd.f32 0.0, %v680
    %v682 = vpop.f32.mrf.mxu0
    %683 = vmatprep.mubr.f32.mxu0 0.0
    %684 = vmatmul.mubr.f32.gmra.mxu0 %v493
    %v685 = vpop.f32.mrf.mxu0
    %v686 = vadd.f32 0.0, %v685
    %v687 = vpop.f32.mrf.mxu0
    %688 = vmatprep.mubr.f32.mxu0 0.0
    %689 = vmatmul.mubr.f32.gmra.mxu0 %v494
    %v690 = vpop.f32.mrf.mxu0
    %v691 = vadd.f32 0.0, %v690
    %v692 = vpop.f32.mrf.mxu0
    %693 = vmatprep.mubr.f32.mxu0 0.0
    %694 = vmatmul.mubr.f32.gmra.mxu0 %v495
    %v695 = vpop.f32.mrf.mxu0
    %v696 = vadd.f32 0.0, %v695
    %v697 = vpop.f32.mrf.mxu0
    %698 = vdwg.mxu0
    %s699 = scalar_lea.vmem %s2, 256
    %v700 = vld [vmem:[%s699] sm:$0xff]
    %v701 = vld [vmem:[%s699 + $0x8] sm:$0xff]
    %v702 = vld [vmem:[%s699 + $0x10] sm:$0xff]
    %v703 = vld [vmem:[%s699 + $0x18] sm:$0xff]
    %v704 = vld [vmem:[%s699 + $0x20] sm:$0xff]
    %v705 = vld [vmem:[%s699 + $0x28] sm:$0xff]
    %v706 = vld [vmem:[%s699 + $0x30] sm:$0xff]
    %v707 = vld [vmem:[%s699 + $0x38] sm:$0xff]
    %v708 = vld [vmem:[%s699 + $0x40] sm:$0xff]
    %v709 = vld [vmem:[%s699 + $0x48] sm:$0xff]
    %v710 = vld [vmem:[%s699 + $0x50] sm:$0xff]
    %v711 = vld [vmem:[%s699 + $0x58] sm:$0xff]
    %v712 = vld [vmem:[%s699 + $0x60] sm:$0xff]
    %v713 = vld [vmem:[%s699 + $0x68] sm:$0xff]
    %v714 = vld [vmem:[%s699 + $0x70] sm:$0xff]
    %v715 = vld [vmem:[%s699 + $0x78] sm:$0xff]
    %716 = vmatprep.subr.mxu0 0.0
    %717 = vmatpush1.msra.mxu0 %v715
    %718 = vmatprep.subr.mxu0 0.0
    %719 = vmatpush1.msra.mxu0 %v714
    %720 = vmatprep.subr.mxu0 0.0
    %721 = vmatpush1.msra.mxu0 %v713
    %722 = vmatprep.subr.mxu0 0.0
    %723 = vmatpush1.msra.mxu0 %v712
    %724 = vmatprep.subr.mxu0 0.0
    %725 = vmatpush1.msra.mxu0 %v711
    %726 = vmatprep.subr.mxu0 0.0
    %727 = vmatpush1.msra.mxu0 %v710
    %728 = vmatprep.subr.mxu0 0.0
    %729 = vmatpush1.msra.mxu0 %v709
    %730 = vmatprep.subr.mxu0 0.0
    %731 = vmatpush1.msra.mxu0 %v708
    %732 = vmatprep.subr.mxu0 0.0
    %733 = vmatpush1.msra.mxu0 %v707
    %734 = vmatprep.subr.mxu0 0.0
    %735 = vmatpush1.msra.mxu0 %v706
    %736 = vmatprep.subr.mxu0 0.0
    %737 = vmatpush1.msra.mxu0 %v705
    %738 = vmatprep.subr.mxu0 0.0
    %739 = vmatpush1.msra.mxu0 %v704
    %740 = vmatprep.subr.mxu0 0.0
    %741 = vmatpush1.msra.mxu0 %v703
    %742 = vmatprep.subr.mxu0 0.0
    %743 = vmatpush1.msra.mxu0 %v702
    %744 = vmatprep.subr.mxu0 0.0
    %745 = vmatpush1.msra.mxu0 %v701
    %746 = vmatprep.subr.mxu0 0.0
    %747 = vmatpush1.msra.mxu0 %v700
    %748 = vmatprep.subr.mxu0 0.0
    %749 = vmatpush2.msra.mxu0 0.0
    %750 = vmatprep.subr.mxu0 0.0
    %751 = vmatpush2.msra.mxu0 0.0
    %752 = vmatprep.subr.mxu0 0.0
    %753 = vmatpush2.msra.mxu0 0.0
    %754 = vmatprep.subr.mxu0 0.0
    %755 = vmatpush2.msra.mxu0 0.0
    %756 = vmatprep.subr.mxu0 0.0
    %757 = vmatpush2.msra.mxu0 0.0
    %758 = vmatprep.subr.mxu0 0.0
    %759 = vmatpush2.msra.mxu0 0.0
    %760 = vmatprep.subr.mxu0 0.0
    %761 = vmatpush2.msra.mxu0 0.0
    %762 = vmatprep.subr.mxu0 0.0
    %763 = vmatpush2.msra.mxu0 0.0
    %764 = vmatprep.subr.mxu0 0.0
    %765 = vmatpush2.msra.mxu0 0.0
    %766 = vmatprep.subr.mxu0 0.0
    %767 = vmatpush2.msra.mxu0 0.0
    %768 = vmatprep.subr.mxu0 0.0
    %769 = vmatpush2.msra.mxu0 0.0
    %770 = vmatprep.subr.mxu0 0.0
    %771 = vmatpush2.msra.mxu0 0.0
    %772 = vmatprep.subr.mxu0 0.0
    %773 = vmatpush2.msra.mxu0 0.0
    %774 = vmatprep.subr.mxu0 0.0
    %775 = vmatpush2.msra.mxu0 0.0
    %776 = vmatprep.subr.mxu0 0.0
    %777 = vmatpush2.msra.mxu0 0.0
    %778 = vmatprep.subr.mxu0 0.0
    %779 = vmatpush2.msra.mxu0 0.0
    %780 = vmatprep.mubr.f32.mxu0 0.0
    %781 = vmatmul.mubr.f32.gmra.mxu0 %v492
    %v782 = vpop.f32.mrf.mxu0
    %v783 = vadd.f32 0.0, %v782
    %v784 = vpop.f32.mrf.mxu0
    %785 = vmatprep.mubr.f32.mxu0 0.0
    %786 = vmatmul.mubr.f32.gmra.mxu0 %v493
    %v787 = vpop.f32.mrf.mxu0
    %v788 = vadd.f32 0.0, %v787
    %v789 = vpop.f32.mrf.mxu0
    %790 = vmatprep.mubr.f32.mxu0 0.0
    %791 = vmatmul.mubr.f32.gmra.mxu0 %v494
    %v792 = vpop.f32.mrf.mxu0
    %v793 = vadd.f32 0.0, %v792
    %v794 = vpop.f32.mrf.mxu0
    %795 = vmatprep.mubr.f32.mxu0 0.0
    %796 = vmatmul.mubr.f32.gmra.mxu0 %v495
    %v797 = vpop.f32.mrf.mxu0
    %v798 = vadd.f32 0.0, %v797
    %v799 = vpop.f32.mrf.mxu0
    %800 = vdwg.mxu0
    %v801 = vrot.slane %v579, 7
    %v802 = vrot.slane %v584, 7
    %v803 = vrot.slane %v589, 7
    %v804 = vrot.slane %v594, 7
    %v805 = vsel %vm394, %v803, %v804
    %v806 = vsel %vm394, %v802, %v803
    %v807 = vsel %vm394, %v801, %v802
    %v808 = vsel %vm394, %v804, %v801
    %v809 = vsel %vm84, %v808, 0.0
    %v810 = vsel %vm85, %v807, 0.0
    %v811 = vsel %vm86, %v806, 0.0
    %v812 = vsel %vm87, %v805, 0.0
    %v813 = vrot.slane %v783, 1
    %v814 = vrot.slane %v788, 1
    %v815 = vrot.slane %v793, 1
    %v816 = vrot.slane %v798, 1
    %v817 = vsel %vm407, %v815, %v816
    %v818 = vsel %vm407, %v814, %v815
    %v819 = vsel %vm407, %v813, %v814
    %v820 = vsel %vm407, %v816, %v813
    %v821 = vsel %vm88, %v819, 0.0
    %v822 = vsel %vm89, %v818, 0.0
    %v823 = vsel %vm90, %v817, 0.0
    %v824 = vsel %vm91, %v820, 0.0
    %v825 = vadd.f32 %v809, %v681
    %v826 = vadd.f32 %v810, %v686
    %v827 = vadd.f32 %v811, %v691
    %v828 = vadd.f32 %v812, %v696
    %v829 = vadd.f32 %v825, %v821
    %v830 = vadd.f32 %v826, %v822
    %v831 = vadd.f32 %v827, %v823
    %v832 = vadd.f32 %v828, %v824
    %v833 = vld [vmem:[%s3 + $0x2] sm:$0x1]
    %v834 = vld [vmem:[%s3 + $0x3] sm:$0x1]
    %v835 = vadd.f32 %v829, %v830
    %v836 = vadd.f32 %v835, %v831
    %v837 = vadd.f32 %v836, %v832
    %v838 = vrot.slane %v837, 4
    %v839 = vadd.f32 %v837, %v838
    %v840 = vrot.slane %v839, 2
    %v841 = vadd.f32 %v839, %v840
    %v842 = vrot.slane %v841, 1
    %v843 = vadd.f32 %v841, %v842
    %v844 = vmul.f32 %v829, %v829
    %v845 = vmul.f32 %v830, %v830
    %v846 = vmul.f32 %v831, %v831
    %v847 = vmul.f32 %v832, %v832
    %v848 = vadd.f32 %v844, %v845
    %v849 = vadd.f32 %v848, %v846
    %v850 = vadd.f32 %v849, %v847
    %v851 = vrot.slane %v850, 4
    %v852 = vadd.f32 %v850, %v851
    %v853 = vrot.slane %v852, 2
    %v854 = vadd.f32 %v852, %v853
    %v855 = vrot.slane %v854, 1
    %v856 = vadd.f32 %v854, %v855
    %v857 = vsel %vm448, %v843, %v856
    %858 = vrot.lane.b32.xlu0 %v857, 8
    %v859 = vpop.permute.xlu0 %858
    %v860 = vadd.f32 %v857, %v859
    %861 = vrot.lane.b32.xlu0 %v860, 16
    %v862 = vpop.permute.xlu0 %861
    %v863 = vadd.f32 %v860, %v862
    %864 = vrot.lane.b32.xlu0 %v863, 32
    %v865 = vpop.permute.xlu0 %864
    %v866 = vadd.f32 %v863, %v865
    %867 = vrot.lane.b32.xlu0 %v866, 64
    %v868 = vpop.permute.xlu0 %867
    %v869 = vadd.f32 %v866, %v868
    %v870 = vmul.f32 %v869, 0.001953125
    %v871 = vmul.f32 %v870, %v870
    %v873 = vrot.slane %v871, 7
    %v875 = vsub.f32 %v870, %v873
    %v876 = vadd.f32 %v875, 1e-05
    %v877 = vrsqrt.pop %v876
    %v879 = vrot.slane %v877, 1
    %v881 = vmul.f32 %v833, %v879
    %v882 = vmul.f32 %v870, %v881
    %v883 = vsub.f32 %v834, %v882
    %v884 = vlaneseq
    %v885 = vshrl.u32 %v884, 7
    %v886 = vsub.s32 0, %v885
    %v887 = vrot.slane %v881, %v886
    %v888 = vmul.f32 %v829, %v887
    %v889 = vmul.f32 %v830, %v887
    %v890 = vmul.f32 %v831, %v887
    %v891 = vmul.f32 %v832, %v887
    %v892 = vlaneseq
    %v893 = vshrl.u32 %v892, 7
    %v894 = vsub.s32 0, %v893
    %v895 = vrot.slane %v883, %v894
    %v896 = vadd.f32 %v888, %v895
    %v897 = vadd.f32 %v889, %v895
    %v898 = vadd.f32 %v890, %v895
    %v899 = vadd.f32 %v891, %v895
    %v900 = vmax.f32 %v896, 0.0
    %v901 = vmax.f32 %v897, 0.0
    %v902 = vmax.f32 %v898, 0.0
    %v903 = vmax.f32 %v899, 0.0
    %904 = vst [vmem:[%s4] sm:$0xff] %v900
    %905 = vst [vmem:[%s4 + $0x8] sm:$0xff] %v901
    %906 = vst [vmem:[%s4 + $0x10] sm:$0xff] %v902
    %907 = vst [vmem:[%s4 + $0x18] sm:$0xff] %v903
    // Predicated region
    $region22: #{conv_block_forward.1} parent=1 // pred_check
      _
    $region23: #{conv_block_forward.1} parent=1 // pred_check_branch
      %909 = sbr.rel (0) target = $region25
    $region24: #{conv_block_forward.1} parent=1 // pred_region
      _
    $region25: #{conv_block_forward.1} parent=1 // pred_fallthru
      _
    // Predicated region
    $region26: #{conv_block_forward.1} parent=1 // pred_check
      _
    $region27: #{conv_block_forward.1} parent=1 // pred_check_branch
      %911 = sbr.rel (0) target = $region29
    $region28: #{conv_block_forward.1} parent=1 // pred_region
      _
    $region29: #{conv_block_forward.1} parent=1 // pred_fallthru
      _
    %912 = vsyncpa [#allocation3], 1

</llo_original>
